<compile_context>
chip_gen: v7x
topology: tpu7x:2x2x1
jax: 0.10.0
libtpu: 0.0.40
codegen_flags: <defaults>
</compile_context>

<pallas_src>
import functools

import jax
import jax.numpy as jnp
import numpy as np
from jax.experimental import pallas as pl
from jax.experimental.pallas import tpu as pltpu

_BLOCK_BUDGET_BYTES = 12 * 1024 * 1024   # budget for pipelined blocks + K matrix
_VMEM_LIMIT_BYTES = 32 * 1024 * 1024     # safe on v5e/v6e (128 MiB) and v7x (64 MiB)


# ----------------------------------------------------------------------------
# Glue: separable resize + edge-pad interpolation matrices (numpy, trace time)
# ----------------------------------------------------------------------------
def _bilinear_weights(in_size: int, out_size: int) -> np.ndarray:
    """(out_size, in_size) bilinear interpolation matrix, half-pixel centers."""
    i = np.arange(out_size, dtype=np.float64)
    src = (i + 0.5) * (in_size / out_size) - 0.5
    src = np.clip(src, 0.0, in_size - 1.0)
    lo = np.floor(src).astype(np.int64)
    hi = np.minimum(lo + 1, in_size - 1)
    w_hi = src - lo
    w_lo = 1.0 - w_hi
    mat = np.zeros((out_size, in_size), dtype=np.float64)
    mat[np.arange(out_size), lo] += w_lo
    mat[np.arange(out_size), hi] += w_hi
    return mat.astype(np.float32)


def _resize_pad_matrix(in_size: int, new_size: int, target: int) -> np.ndarray:
    """(target, in_size) matrix = bilinear resize to new_size + centered edge pad."""
    resize_w = _bilinear_weights(in_size, new_size)              # (new, in)
    offset = (target - new_size) // 2                            # left/top pad
    rows = np.clip(np.arange(target) - offset, 0, new_size - 1)  # edge replication
    return resize_w[rows]                                        # (target, in)


def _choose_block_planes(nc: int, hw: int, tt: int) -> int:
    """Planes per grid step, sized against a VMEM budget (multiple of 8)."""
    kron_bytes = 2 * hw * tt * 4            # K matrix (counted double-buffered)
    if kron_bytes > _BLOCK_BUDGET_BYTES:
        # TODO(synk): fall back to a separable two-matmul kernel for big shapes.
        raise NotImplementedError(
            "fused resize+pad matrix too large for VMEM; separable kernel needed")
    per_plane = 2 * (hw + tt) * 4           # double-buffered input + output rows
    cap = max(8, ((_BLOCK_BUDGET_BYTES - kron_bytes) // per_plane) // 8 * 8)
    nc_pad8 = -(-nc // 8) * 8
    p = min(cap, nc_pad8)
    if nc_pad8 >= 16:                       # keep >=2 grid steps (v7x: 2 TCs)
        p = min(p, max(8, (nc_pad8 // 2) // 8 * 8))
    return int(p)


# ----------------------------------------------------------------------------
# Pallas kernel: one lane-dense matmul per block of P image planes
# ----------------------------------------------------------------------------
def _resize_pad_kernel(x_ref, k_ref, o_ref):
    # x_ref: (P, H*W), k_ref: (H*W, T*T), o_ref: (P, T*T)
    o_ref[...] = jnp.dot(
        x_ref[...], k_ref[...], preferred_element_type=jnp.float32
    ).astype(o_ref.dtype)


@functools.partial(jax.jit, static_argnames=("block_planes",))
def _resize_pad_call(img_flat, kmat, *, block_planes):
    nc_pad, hw = img_flat.shape
    _, tt = kmat.shape
    grid = (nc_pad // block_planes,)
    cost = pl.CostEstimate(
        flops=2 * nc_pad * hw * tt,
        transcendentals=0,
        bytes_accessed=4 * (nc_pad * hw + hw * tt + nc_pad * tt),
    )
    return pl.pallas_call(
        _resize_pad_kernel,
        out_shape=jax.ShapeDtypeStruct((nc_pad, tt), jnp.float32),
        grid_spec=pltpu.PrefetchScalarGridSpec(
            num_scalar_prefetch=0,
            grid=grid,
            in_specs=[
                pl.BlockSpec((block_planes, hw), lambda i: (i, 0)),  # P planes
                pl.BlockSpec((hw, tt), lambda i: (0, 0)),            # K, resident
            ],
            out_specs=pl.BlockSpec((block_planes, tt), lambda i: (i, 0)),
        ),
        compiler_params=pltpu.CompilerParams(
            dimension_semantics=("parallel",),
            vmem_limit_bytes=_VMEM_LIMIT_BYTES,
        ),
        cost_estimate=cost,
    )(img_flat, kmat)


def resize_a_pad(img_nchw: jax.Array, target_size: int) -> jax.Array:
    """ResizeAPad forward (scaling=False path) on an NCHW float batch."""
    n, c, h, w = img_nchw.shape
    t = target_size
    scale = min(t / w, t / h)
    new_w, new_h = int(w * scale), int(h * scale)          # matches reference int()

    a_mat = _resize_pad_matrix(h, new_h, t)                # (T, H)  height op
    b_mat = _resize_pad_matrix(w, new_w, t).T              # (W, T)  width op
    # K[h*W + w, i*T + j] = A[i, h] * B[w, j]
    kmat = jnp.asarray(np.kron(a_mat.T, b_mat))            # (H*W, T*T)

    nc, hw, tt = n * c, h * w, t * t
    block_planes = _choose_block_planes(nc, hw, tt)
    nc_pad = -(-nc // block_planes) * block_planes

    img_flat = img_nchw.astype(jnp.float32).reshape(nc, hw)
    if nc_pad != nc:
        img_flat = jnp.pad(img_flat, ((0, nc_pad - nc), (0, 0)))

    out = _resize_pad_call(img_flat, kmat, block_planes=block_planes)
    return out[:nc].reshape(n, c, t, t)


# ----------------------------------------------------------------------------
# Demo / self-check
# ----------------------------------------------------------------------------
def _reference_numpy(img_nchw: np.ndarray, target_size: int) -> np.ndarray:
    n, c, h, w = img_nchw.shape
    t = target_size
    scale = min(t / w, t / h)
    new_w, new_h = int(w * scale), int(h * scale)
    a_mat = _resize_pad_matrix(h, new_h, t)                # (T, H)
    b_mat = _resize_pad_matrix(w, new_w, t).T              # (W, T)
    return np.einsum("th,nchw,ws->ncts",
                     a_mat.astype(np.float64),
                     img_nchw.astype(np.float64),
                     b_mat.astype(np.float64))


if __name__ == "__main__":
    key = jax.random.PRNGKey(0)
    N, C, H, W = 2, 3, 12, 20
    TARGET = 16
    img = jax.random.uniform(key, (N, C, H, W), dtype=jnp.float32) * 255.0

    out = resize_a_pad(img, TARGET)
    jax.block_until_ready(out)

    assert out.shape == (N, C, TARGET, TARGET), out.shape
    assert out.dtype == jnp.float32

    # Correctness sanity check vs a numpy reference of the same semantics.
    # Loose tolerance: MXU default-precision f32 matmul on 0-255 pixel values.
    ref = _reference_numpy(np.asarray(img), TARGET)
    assert np.allclose(np.asarray(out), ref, rtol=2e-2, atol=2.0), (
        float(np.max(np.abs(np.asarray(out) - ref))))

    print("KERNEL_OK")
</pallas_src>

<mosaic_0001>
module attributes {stable_mosaic.version = 11 : i64} {
  func.func @_resize_pad_kernel(%arg0: i32, %arg1: memref<8x240xf32, #tpu.memory_space<vmem>>, %arg2: memref<240x256xf32, #tpu.memory_space<vmem>>, %arg3: memref<8x256xf32, #tpu.memory_space<vmem>>) attributes {dimension_semantics = [#tpu.dimension_semantics<parallel>], iteration_bounds = array<i64: 1>, scalar_prefetch = 0 : i64, scratch_operands = 0 : i64, tpu.core_type = #tpu.core_type<tc>, window_params = [{transform_indices = @transform_0, window_bounds = array<i64: 8, 240>}, {pipeline_mode = #tpu.pipeline_mode<synchronous>, transform_indices = @transform_1, window_bounds = array<i64: 240, 256>}, {transform_indices = @transform_2, window_bounds = array<i64: 8, 256>}]} {
    %c0 = arith.constant 0 : index
    %c0_0 = arith.constant 0 : index
    %0 = vector.load %arg1[%c0, %c0_0] : memref<8x240xf32, #tpu.memory_space<vmem>>, vector<8x240xf32>
    %c0_1 = arith.constant 0 : index
    %c0_2 = arith.constant 0 : index
    %1 = vector.load %arg2[%c0_1, %c0_2] : memref<240x256xf32, #tpu.memory_space<vmem>>, vector<240x256xf32>
    %cst = arith.constant dense<0.000000e+00> : vector<8x256xf32>
    %2 = tpu.matmul %0, %1, %cst {dimension_numbers = #tpu.dot_dimension_numbers<[1], [0], [0], [1], [0, 0, 1, 1], [], []>} : vector<8x240xf32>, vector<240x256xf32>, vector<8x256xf32> -> vector<8x256xf32>
    %c0_3 = arith.constant 0 : index
    %c0_4 = arith.constant 0 : index
    %3 = vector.load %arg3[%c0_3, %c0_4] : memref<8x256xf32, #tpu.memory_space<vmem>>, vector<8x256xf32>
    tpu.vector_store %arg3[%c0_3, %c0_4], %2 {strides = array<i32>} : memref<8x256xf32, #tpu.memory_space<vmem>>, vector<8x256xf32>,
    return
  }
  func.func @transform_0(%arg0: i32) -> (i32, i32) {
    %c0_i32 = arith.constant 0 : i32
    %c0_i32_0 = arith.constant 0 : i32
    return %arg0, %c0_i32 : i32, i32
  }
  func.func @transform_1(%arg0: i32) -> (i32, i32) {
    %c0_i32 = arith.constant 0 : i32
    %c0_i32_0 = arith.constant 0 : i32
    %c0_i32_1 = arith.constant 0 : i32
    return %c0_i32, %c0_i32_0 : i32, i32
  }
  func.func @transform_2(%arg0: i32) -> (i32, i32) {
    %c0_i32 = arith.constant 0 : i32
    %c0_i32_0 = arith.constant 0 : i32
    return %arg0, %c0_i32 : i32, i32
  }
}

</mosaic_0001>

<llo_original>
// kernel: _resize_pad_call.1
$region0: #{_resize_pad_call.1}
  #allocation0 [shape = 'u32[]', space=smem, size = 0x4, offset = 0x4, fixed_abs, tag = 'smem constant byte address 0x4 - core index']
  #allocation1 [shape = 'u32[144,128]{1,0:T(1,128)}', space=vmem, size = 0x12000, scoped, tag = 'internal scratch']
  %s0 = inlined_call_operand.hbm [shape: f32[8,240], index: 0, kind: input, shape index: {}]
  %s1 = inlined_call_operand.hbm [shape: f32[240,256], index: 1, kind: input, shape index: {}]
  %s2 = inlined_call_operand.hbm [shape: f32[8,256], index: 2, kind: output, shape index: {}]
  %s3 = sld [smem:[#allocation0]]
  $region26: #{_resize_pad_call.1} parent=0
    _
  %s5 = ssub.s32 1, %s3
  %s6 = scalar_select 0, %s5, %s3
  $region1: #{_resize_pad_call.1} parent=0
    #allocation2 [shape = 'u8[8192]{0}', space=vmem, size = 0x2000, scoped, tag = 'input window, operand 0, single buffered']
    #allocation3 [shape = 's32[1]{0}', space=sflag, size = 0x4, scoped, tag = 'scoped memory for _resize_pad_call.1']
    #allocation4 [shape = 's32[1]{0}', space=sflag, size = 0x4, scoped, tag = 'scoped memory for _resize_pad_call.1']
    #allocation5 [shape = 'u8[245760]{0}', space=vmem, size = 0x3c000, scoped, tag = 'input window, operand 1, single buffered']
    #allocation6 [shape = 's32[1]{0}', space=sflag, size = 0x4, scoped, tag = 'scoped memory for _resize_pad_call.1']
    #allocation7 [shape = 'u8[8192]{0}', space=vmem, size = 0x2000, scoped, tag = 'output window, operand 0, single buffered']
    %7 = vsyncpa [#allocation3], 0
    %8 = vsyncpa [#allocation6], 0
    %9 = vsyncpa [#allocation4], 0
    // Predicated region
    $region2: #{_resize_pad_call.1} parent=1 // pred_check
      _
    $region3: #{_resize_pad_call.1} parent=1 // pred_check_branch
      %11 = sbr.rel (0) target = $region5
    $region4: #{_resize_pad_call.1} parent=1 // pred_region
      %s13 = ssub.s32 256, 256
      %14 = vsyncadd [#allocation3], %s13
      %s16 = sshll.u32 [#allocation2], 4
      %s17 = int_to_ptr.vmem [resolvable:$true] %s16
      %19 = dma.hbm_to_vmem [thread:$0]  %s0, 256, %s17, [#allocation3]
    $region5: #{_resize_pad_call.1} parent=1 // pred_fallthru
      _
    // Predicated region
    $region6: #{_resize_pad_call.1} parent=1 // pred_check
      _
    $region7: #{_resize_pad_call.1} parent=1 // pred_check_branch
      %21 = sbr.rel (0) target = $region9
    $region8: #{_resize_pad_call.1} parent=1 // pred_region
      %s23 = ssub.s32 7680, 7680
      %24 = vsyncadd [#allocation6], %s23
      %s25 = sshll.u32 [#allocation5], 4
      %s26 = int_to_ptr.vmem [resolvable:$true] %s25
      %31 = dma.hbm_to_vmem [thread:$0]  %s1, 7680, %s26, [#allocation6], 256, 256, 16
    $region9: #{_resize_pad_call.1} parent=1 // pred_fallthru
      _
    // Predicated region
    $region10: #{_resize_pad_call.1} parent=1 // pred_check
      _
    $region11: #{_resize_pad_call.1} parent=1 // pred_check_branch
      %33 = sbr.rel (0) target = $region13
    $region12: #{_resize_pad_call.1} parent=1 // pred_region
      %34 = dma.done [#allocation3], 256
    $region13: #{_resize_pad_call.1} parent=1 // pred_fallthru
      _
    // Predicated region
    $region14: #{_resize_pad_call.1} parent=1 // pred_check
      _
    $region15: #{_resize_pad_call.1} parent=1 // pred_check_branch
      %36 = sbr.rel (0) target = $region17
    $region16: #{_resize_pad_call.1} parent=1 // pred_region
      %37 = dma.done [#allocation6], 7680
    $region17: #{_resize_pad_call.1} parent=1 // pred_fallthru
      _
    %v38 = vld [vmem:[#allocation2] sm:$0xff]
    %v39 = vld [vmem:[#allocation2 + $0x8] sm:$0xff]
    %v40 = vld [vmem:[#allocation5] sm:$0xff]
    %v41 = vld [vmem:[#allocation5 + $0x8] sm:$0xff]
    %v42 = vld [vmem:[#allocation5 + $0x10] sm:$0xff]
    %v43 = vld [vmem:[#allocation5 + $0x18] sm:$0xff]
    %v44 = vld [vmem:[#allocation5 + $0x20] sm:$0xff]
    %v45 = vld [vmem:[#allocation5 + $0x28] sm:$0xff]
    %v46 = vld [vmem:[#allocation5 + $0x30] sm:$0xff]
    %v47 = vld [vmem:[#allocation5 + $0x38] sm:$0xff]
    %v48 = vld [vmem:[#allocation5 + $0x40] sm:$0xff]
    %v49 = vld [vmem:[#allocation5 + $0x48] sm:$0xff]
    %v50 = vld [vmem:[#allocation5 + $0x50] sm:$0xff]
    %v51 = vld [vmem:[#allocation5 + $0x58] sm:$0xff]
    %v52 = vld [vmem:[#allocation5 + $0x60] sm:$0xff]
    %v53 = vld [vmem:[#allocation5 + $0x68] sm:$0xff]
    %v54 = vld [vmem:[#allocation5 + $0x70] sm:$0xff]
    %v55 = vld [vmem:[#allocation5 + $0x78] sm:$0xff]
    %v56 = vld [vmem:[#allocation5 + $0x80] sm:$0xff]
    %v57 = vld [vmem:[#allocation5 + $0x88] sm:$0xff]
    %v58 = vld [vmem:[#allocation5 + $0x90] sm:$0xff]
    %v59 = vld [vmem:[#allocation5 + $0x98] sm:$0xff]
    %v60 = vld [vmem:[#allocation5 + $0xa0] sm:$0xff]
    %v61 = vld [vmem:[#allocation5 + $0xa8] sm:$0xff]
    %v62 = vld [vmem:[#allocation5 + $0xb0] sm:$0xff]
    %v63 = vld [vmem:[#allocation5 + $0xb8] sm:$0xff]
    %v64 = vld [vmem:[#allocation5 + $0xc0] sm:$0xff]
    %v65 = vld [vmem:[#allocation5 + $0xc8] sm:$0xff]
    %v66 = vld [vmem:[#allocation5 + $0xd0] sm:$0xff]
    %v67 = vld [vmem:[#allocation5 + $0xd8] sm:$0xff]
    %v68 = vld [vmem:[#allocation5 + $0xe0] sm:$0xff]
    %v69 = vld [vmem:[#allocation5 + $0xe8] sm:$0xff]
    %v70 = vld [vmem:[#allocation5 + $0xf0] sm:$0xff]
    %v71 = vld [vmem:[#allocation5 + $0xf8] sm:$0xff]
    %v72 = vld [vmem:[#allocation5 + $0x100] sm:$0xff]
    %v73 = vld [vmem:[#allocation5 + $0x108] sm:$0xff]
    %v74 = vld [vmem:[#allocation5 + $0x110] sm:$0xff]
    %v75 = vld [vmem:[#allocation5 + $0x118] sm:$0xff]
    %v76 = vld [vmem:[#allocation5 + $0x120] sm:$0xff]
    %v77 = vld [vmem:[#allocation5 + $0x128] sm:$0xff]
    %v78 = vld [vmem:[#allocation5 + $0x130] sm:$0xff]
    %v79 = vld [vmem:[#allocation5 + $0x138] sm:$0xff]
    %v80 = vld [vmem:[#allocation5 + $0x140] sm:$0xff]
    %v81 = vld [vmem:[#allocation5 + $0x148] sm:$0xff]
    %v82 = vld [vmem:[#allocation5 + $0x150] sm:$0xff]
    %v83 = vld [vmem:[#allocation5 + $0x158] sm:$0xff]
    %v84 = vld [vmem:[#allocation5 + $0x160] sm:$0xff]
    %v85 = vld [vmem:[#allocation5 + $0x168] sm:$0xff]
    %v86 = vld [vmem:[#allocation5 + $0x170] sm:$0xff]
    %v87 = vld [vmem:[#allocation5 + $0x178] sm:$0xff]
    %v88 = vld [vmem:[#allocation5 + $0x180] sm:$0xff]
    %v89 = vld [vmem:[#allocation5 + $0x188] sm:$0xff]
    %v90 = vld [vmem:[#allocation5 + $0x190] sm:$0xff]
    %v91 = vld [vmem:[#allocation5 + $0x198] sm:$0xff]
    %v92 = vld [vmem:[#allocation5 + $0x1a0] sm:$0xff]
    %v93 = vld [vmem:[#allocation5 + $0x1a8] sm:$0xff]
    %v94 = vld [vmem:[#allocation5 + $0x1b0] sm:$0xff]
    %v95 = vld [vmem:[#allocation5 + $0x1b8] sm:$0xff]
    %v96 = vld [vmem:[#allocation5 + $0x1c0] sm:$0xff]
    %v97 = vld [vmem:[#allocation5 + $0x1c8] sm:$0xff]
    %v98 = vld [vmem:[#allocation5 + $0x1d0] sm:$0xff]
    %v99 = vld [vmem:[#allocation5 + $0x1d8] sm:$0xff]
    %vm100 = vcmask 916480
    %v102 = vsel %vm100, %v39, 0
    %104 = vmatprep.subr.mxu0 %v41
    %105 = vmatpush1.msra.mxu0 %v40
    %106 = vmatprep.subr.mxu0 %v43
    %107 = vmatpush1.msra.mxu0 %v42
    %108 = vmatprep.subr.mxu0 %v45
    %109 = vmatpush1.msra.mxu0 %v44
    %110 = vmatprep.subr.mxu0 %v47
    %111 = vmatpush1.msra.mxu0 %v46
    %112 = vmatprep.subr.mxu0 %v49
    %113 = vmatpush1.msra.mxu0 %v48
    %114 = vmatprep.subr.mxu0 %v51
    %115 = vmatpush1.msra.mxu0 %v50
    %116 = vmatprep.subr.mxu0 %v53
    %117 = vmatpush1.msra.mxu0 %v52
    %118 = vmatprep.subr.mxu0 %v55
    %119 = vmatpush1.msra.mxu0 %v54
    %120 = vmatprep.subr.mxu0 %v57
    %121 = vmatpush1.msra.mxu0 %v56
    %122 = vmatprep.subr.mxu0 %v59
    %123 = vmatpush1.msra.mxu0 %v58
    %124 = vmatprep.subr.mxu0 %v61
    %125 = vmatpush1.msra.mxu0 %v60
    %126 = vmatprep.subr.mxu0 %v63
    %127 = vmatpush1.msra.mxu0 %v62
    %128 = vmatprep.subr.mxu0 %v65
    %129 = vmatpush1.msra.mxu0 %v64
    %130 = vmatprep.subr.mxu0 %v67
    %131 = vmatpush1.msra.mxu0 %v66
    %132 = vmatprep.subr.mxu0 %v69
    %133 = vmatpush1.msra.mxu0 %v68
    %134 = vmatprep.subr.mxu0 %v71
    %135 = vmatpush1.msra.mxu0 %v70
    %136 = vmatprep.subr.mxu0 %v73
    %137 = vmatpush1.msra.mxu0 %v72
    %138 = vmatprep.subr.mxu0 %v75
    %139 = vmatpush1.msra.mxu0 %v74
    %140 = vmatprep.subr.mxu0 %v77
    %141 = vmatpush1.msra.mxu0 %v76
    %142 = vmatprep.subr.mxu0 %v79
    %143 = vmatpush1.msra.mxu0 %v78
    %144 = vmatprep.subr.mxu0 %v81
    %145 = vmatpush1.msra.mxu0 %v80
    %146 = vmatprep.subr.mxu0 %v83
    %147 = vmatpush1.msra.mxu0 %v82
    %148 = vmatprep.subr.mxu0 %v85
    %149 = vmatpush1.msra.mxu0 %v84
    %150 = vmatprep.subr.mxu0 %v87
    %151 = vmatpush1.msra.mxu0 %v86
    %152 = vmatprep.subr.mxu0 %v89
    %153 = vmatpush1.msra.mxu0 %v88
    %154 = vmatprep.subr.mxu0 %v91
    %155 = vmatpush1.msra.mxu0 %v90
    %156 = vmatprep.subr.mxu0 %v93
    %157 = vmatpush1.msra.mxu0 %v92
    %158 = vmatprep.subr.mxu0 %v95
    %159 = vmatpush1.msra.mxu0 %v94
    %160 = vmatprep.subr.mxu0 %v97
    %161 = vmatpush1.msra.mxu0 %v96
    %162 = vmatprep.subr.mxu0 %v99
    %163 = vmatpush1.msra.mxu0 %v98
    %164 = vmatprep.subr.mxu0 0.0
    %165 = vmatpush1.msra.mxu0 0.0
    %166 = vmatprep.subr.mxu0 0.0
    %167 = vmatpush1.msra.mxu0 0.0
    %168 = vmatprep.mubr.f32.mxu0 %v102
    %169 = vmatmul.mubr.f32.gmra.mrb[0].mxu0 %v38
    %v170 = vpop.f32.mrb[0].mxu0
    %v171 = vadd.f32 0.0, %v170
    %v172 = vpop.f32.mrb[0].mxu0
    %v173 = vadd.f32 0.0, %v172
    %174 = vdwg.mxu0
    %175 = vst [vmem:[#allocation7] sm:$0xff] %v171
    %176 = vst [vmem:[#allocation7 + $0x8] sm:$0xff] %v173
    // Predicated region
    $region18: #{_resize_pad_call.1} parent=1 // pred_check
      _
    $region19: #{_resize_pad_call.1} parent=1 // pred_check_branch
      %178 = sbr.rel (0) target = $region21
    $region20: #{_resize_pad_call.1} parent=1 // pred_region
      %s180 = ssub.s32 256, 256
      %181 = vsyncadd [#allocation4], %s180
      %s183 = sshll.u32 [#allocation7], 4
      %s184 = int_to_ptr.vmem [resolvable:$true] %s183
      %186 = dma.vmem_to_hbm [thread:$0]  %s184, 256, %s2, [#allocation4]
    $region21: #{_resize_pad_call.1} parent=1 // pred_fallthru
      _
    // Predicated region
    $region22: #{_resize_pad_call.1} parent=1 // pred_check
      _
    $region23: #{_resize_pad_call.1} parent=1 // pred_check_branch
      %188 = sbr.rel (0) target = $region25
    $region24: #{_resize_pad_call.1} parent=1 // pred_region
      %189 = dma.done [#allocation4], 256
    $region25: #{_resize_pad_call.1} parent=1 // pred_fallthru
      _
    %190 = vsyncpa [#allocation3], 1
    %191 = vsyncpa [#allocation6], 1
    %192 = vsyncpa [#allocation4], 1

</llo_original>
